<compile_context>
chip_gen: v7x
topology: tpu7x:2x2x1
jax: 0.10.0
libtpu: 0.0.40
codegen_flags: <defaults>
</compile_context>

<pallas_src>
import functools

import jax
import jax.numpy as jnp
from jax.experimental import pallas as pl
from jax.experimental.pallas import tpu as pltpu


def _round_up(x, m):
    return ((x + m - 1) // m) * m


def _proj_kernel(x_ref, w_ref, b_ref, o_ref):
    # x_ref: (TM, K)   patch rows (one row per output spatial location)
    # w_ref: (K, TE)   reshaped conv weight (block index constant -> resident)
    # b_ref: (1, TE)   bias (f32, resident)
    # o_ref: (TM, TE)
    acc = jnp.dot(x_ref[...], w_ref[...], preferred_element_type=jnp.float32)
    o_ref[...] = (acc + b_ref[...]).astype(o_ref.dtype)


def _vmem_bytes(tm, k, te, in_bytes, out_bytes):
    # double-buffered patch / weight / bias inputs + double-buffered output
    return (2 * tm * k * in_bytes
            + 2 * k * te * in_bytes
            + 2 * te * 4
            + 2 * tm * te * out_bytes)


def patch_embed_pallas(x_nchw, weight, bias, patch_size, kernel_size=None,
                       compute_dtype=jnp.bfloat16, tm=1024,
                       output_layout="NCHW"):
    """Equivalent of PatchEmbed.forward for the default kernel_size==patch_size.

    x_nchw:  (N, C, H, W)
    weight:  (E, C, k, k)    (PyTorch Conv2d weight layout)
    bias:    (E,)
    compute_dtype: dtype of the matmul inputs (default bf16). Accumulation is
                   always f32; the output keeps x.dtype.
    output_layout: "NCHW" (Conv2d contract) or "NLC" (N, tokens, E) to skip
                   the output transpose when the consumer takes tokens.
    returns: (N, E, H//p, W//p) for "NCHW".
    """
    if kernel_size is None:
        kernel_size = patch_size
    pad = (kernel_size - patch_size + 1) // 2
    if pad > 0:
        # reflect padding is cheap glue, done in plain JAX
        x_nchw = jnp.pad(x_nchw, ((0, 0), (0, 0), (pad, pad), (pad, pad)),
                         mode="reflect")
    # TODO(synk): overlapping-kernel (kernel_size != patch_size) im2col path not
    # implemented; the module's default config has kernel_size == patch_size.
    assert kernel_size == patch_size, "only non-overlapping patch conv supported"

    N, C, H, W = x_nchw.shape
    p = patch_size
    E = weight.shape[0]
    Hp, Wp = H // p, W // p
    out_dtype = x_nchw.dtype
    if compute_dtype is None:
        compute_dtype = out_dtype
    in_bytes = jnp.dtype(compute_dtype).itemsize
    out_bytes = jnp.dtype(out_dtype).itemsize

    # ---- im2col (XLA glue), cast first so the transpose pass moves
    # compute_dtype bytes rather than f32.
    # TODO(synk): fusing this im2col into the kernel (BlockSpec pulling a
    # (C, rows*p, W) band + in-VMEM shuffle) would remove one more HBM pass,
    # but the lane-splitting relayout it needs does not lower reliably in
    # Mosaic, so it stays as XLA glue.
    M = N * Hp * Wp
    K = C * p * p
    patches = x_nchw.astype(compute_dtype)
    patches = patches.reshape(N, C, Hp, p, Wp, p)
    patches = patches.transpose(0, 2, 4, 1, 3, 5)          # (N, Hp, Wp, C, p, p)
    patches = patches.reshape(M, K)                         # (M, K)  no padding

    # ---- weight / bias: tiny, pad E to a lane-dense multiple of 128
    E_pad = _round_up(E, 128)
    w2d = weight.reshape(E, K).transpose(1, 0)               # (K, E)
    if E_pad != E:
        w2d = jnp.pad(w2d, ((0, 0), (0, E_pad - E)))
    w2d = w2d.astype(compute_dtype)
    b2d = bias.astype(jnp.float32).reshape(1, E)
    if E_pad != E:
        b2d = jnp.pad(b2d, ((0, 0), (0, E_pad - E)))

    # ---- E tiling: single block (weight truly resident) unless the weight
    # block itself would blow the VMEM budget; then pick a 128-multiple
    # divisor of E_pad (no over-padding of E).
    WEIGHT_BUDGET = 8 * 1024 * 1024           # double-buffered weight block
    if 2 * K * E_pad * in_bytes <= WEIGHT_BUDGET:
        TE = E_pad
    else:
        TE = 128
        for cand in range(E_pad - 128, 127, -128):
            if E_pad % cand == 0 and 2 * K * cand * in_bytes <= WEIGHT_BUDGET:
                TE = cand
                break
    n_e = E_pad // TE

    # ---- M tiling against an explicit VMEM budget (v7x: 64 MiB physical).
    VMEM_BUDGET = 24 * 1024 * 1024
    if M <= 16:
        TM = M                                 # single full-dim block
    else:
        TM = min(_round_up(max(tm, 16), 16), _round_up(M, 16))
        TM = min(TM, _round_up(pl.cdiv(M, 2), 16))   # >=2 M tiles (v7x megacore)
        while TM > 16 and _vmem_bytes(TM, K, TE, in_bytes, out_bytes) > VMEM_BUDGET:
            TM = _round_up(TM // 2, 16)
    n_m = pl.cdiv(M, TM)

    vmem_need = _vmem_bytes(TM, K, TE, in_bytes, out_bytes)
    vmem_limit = int(min(64 * 1024 * 1024,
                         max(32 * 1024 * 1024, 2 * vmem_need)))

    cost = pl.CostEstimate(
        flops=2 * M * K * E_pad,
        transcendentals=0,
        bytes_accessed=(n_e * M * K * in_bytes        # patches, once per E tile
                        + K * E_pad * in_bytes        # weight, streamed once
                        + E_pad * 4                   # bias
                        + M * E_pad * out_bytes),     # output
    )

    if n_e == 1:
        grid = (n_m,)
        in_specs = [
            pl.BlockSpec((TM, K), lambda i: (i, 0)),       # patch rows
            pl.BlockSpec((K, TE), lambda i: (0, 0)),       # weight (resident)
            pl.BlockSpec((1, TE), lambda i: (0, 0)),       # bias   (resident)
        ]
        out_specs = pl.BlockSpec((TM, TE), lambda i: (i, 0))
        dim_sem = ("parallel",)
    else:
        # E outermost so the weight block stays resident across the inner M sweep
        grid = (n_e, n_m)
        in_specs = [
            pl.BlockSpec((TM, K), lambda j, i: (i, 0)),
            pl.BlockSpec((K, TE), lambda j, i: (0, j)),
            pl.BlockSpec((1, TE), lambda j, i: (0, j)),
        ]
        out_specs = pl.BlockSpec((TM, TE), lambda j, i: (i, j))
        dim_sem = ("parallel", "parallel")

    out = pl.pallas_call(
        _proj_kernel,
        out_shape=jax.ShapeDtypeStruct((M, E_pad), out_dtype),
        grid_spec=pltpu.PrefetchScalarGridSpec(
            num_scalar_prefetch=0,
            grid=grid,
            in_specs=in_specs,
            out_specs=out_specs,
        ),
        compiler_params=pltpu.CompilerParams(
            dimension_semantics=dim_sem,
            vmem_limit_bytes=vmem_limit),
        cost_estimate=cost,
    )(patches, w2d, b2d)

    if E_pad != E:
        out = out[:, :E]
    if output_layout == "NLC":
        return out.reshape(N, Hp * Wp, E)                  # tokens, no transpose
    # Conv2d NCHW output layout (the module's contract)
    return out.reshape(N, Hp, Wp, E).transpose(0, 3, 1, 2)  # (N, E, Hp, Wp)


if __name__ == "__main__":
    # small deterministic config
    batch, in_chans, H, W = 2, 4, 16, 16
    patch_size = 4
    embed_dim = 32

    key = jax.random.PRNGKey(0)
    kx, kw, kb = jax.random.split(key, 3)

    x = jax.random.normal(kx, (batch, in_chans, H, W), dtype=jnp.float32)
    fan_in = in_chans * patch_size * patch_size
    weight = jax.random.normal(kw, (embed_dim, in_chans, patch_size, patch_size),
                               dtype=jnp.float32) * (1.0 / fan_in) ** 0.5
    bias = jax.random.normal(kb, (embed_dim,), dtype=jnp.float32) * 0.01

    # reference: XLA conv
    ref = jax.lax.conv_general_dilated(
        x, weight, window_strides=(patch_size, patch_size), padding="VALID",
        dimension_numbers=("NCHW", "OIHW", "NCHW")) + bias.reshape(1, -1, 1, 1)

    # default path: bf16 matmul inputs, f32 accumulation — looser tolerance
    run_bf16 = jax.jit(functools.partial(patch_embed_pallas, patch_size=patch_size))
    out_bf16 = jax.block_until_ready(run_bf16(x, weight, bias))
    assert out_bf16.shape == (batch, embed_dim, H // patch_size, W // patch_size)
    assert jnp.allclose(out_bf16, ref, atol=5e-2, rtol=5e-2)

    # explicit f32 compute path — tight tolerance
    run_f32 = jax.jit(functools.partial(patch_embed_pallas, patch_size=patch_size,
                                        compute_dtype=jnp.float32))
    out_f32 = jax.block_until_ready(run_f32(x, weight, bias))
    assert out_f32.shape == out_bf16.shape
    assert jnp.allclose(out_f32, ref, atol=2e-4, rtol=2e-4)

    print("KERNEL_OK")
</pallas_src>

<mosaic_0001>
module attributes {stable_mosaic.version = 11 : i64} {
  func.func @_proj_kernel(%arg0: i32, %arg1: memref<16x64xbf16, #tpu.memory_space<vmem>>, %arg2: memref<64x128xbf16, #tpu.memory_space<vmem>>, %arg3: memref<1x128xf32, #tpu.memory_space<vmem>>, %arg4: memref<16x128xf32, #tpu.memory_space<vmem>>) attributes {dimension_semantics = [#tpu.dimension_semantics<parallel>], iteration_bounds = array<i64: 2>, scalar_prefetch = 0 : i64, scratch_operands = 0 : i64, tpu.core_type = #tpu.core_type<tc>, window_params = [{transform_indices = @transform_0, window_bounds = array<i64: 16, 64>}, {pipeline_mode = #tpu.pipeline_mode<synchronous>, transform_indices = @transform_1, window_bounds = array<i64: 64, 128>}, {pipeline_mode = #tpu.pipeline_mode<synchronous>, transform_indices = @transform_2, window_bounds = array<i64: 1, 128>}, {transform_indices = @transform_3, window_bounds = array<i64: 16, 128>}]} {
    %c0 = arith.constant 0 : index
    %c0_0 = arith.constant 0 : index
    %0 = vector.load %arg1[%c0, %c0_0] : memref<16x64xbf16, #tpu.memory_space<vmem>>, vector<16x64xbf16>
    %c0_1 = arith.constant 0 : index
    %c0_2 = arith.constant 0 : index
    %1 = vector.load %arg2[%c0_1, %c0_2] : memref<64x128xbf16, #tpu.memory_space<vmem>>, vector<64x128xbf16>
    %cst = arith.constant dense<0.000000e+00> : vector<16x128xf32>
    %2 = tpu.matmul %0, %1, %cst {dimension_numbers = #tpu.dot_dimension_numbers<[1], [0], [0], [1], [0, 0, 1, 1], [], []>} : vector<16x64xbf16>, vector<64x128xbf16>, vector<16x128xf32> -> vector<16x128xf32>
    %c0_3 = arith.constant 0 : index
    %c0_4 = arith.constant 0 : index
    %3 = vector.load %arg3[%c0_3, %c0_4] : memref<1x128xf32, #tpu.memory_space<vmem>>, vector<1x128xf32>
    %4 = vector.broadcast %3 : vector<1x128xf32> to vector<16x128xf32>
    %5 = arith.addf %2, %4 : vector<16x128xf32>
    %c0_5 = arith.constant 0 : index
    %c0_6 = arith.constant 0 : index
    %6 = vector.load %arg4[%c0_5, %c0_6] : memref<16x128xf32, #tpu.memory_space<vmem>>, vector<16x128xf32>
    tpu.vector_store %arg4[%c0_5, %c0_6], %5 {strides = array<i32>} : memref<16x128xf32, #tpu.memory_space<vmem>>, vector<16x128xf32>,
    return
  }
  func.func @transform_0(%arg0: i32) -> (i32, i32) {
    %c0_i32 = arith.constant 0 : i32
    %c0_i32_0 = arith.constant 0 : i32
    return %arg0, %c0_i32 : i32, i32
  }
  func.func @transform_1(%arg0: i32) -> (i32, i32) {
    %c0_i32 = arith.constant 0 : i32
    %c0_i32_0 = arith.constant 0 : i32
    %c0_i32_1 = arith.constant 0 : i32
    return %c0_i32, %c0_i32_0 : i32, i32
  }
  func.func @transform_2(%arg0: i32) -> (i32, i32) {
    %c0_i32 = arith.constant 0 : i32
    %c0_i32_0 = arith.constant 0 : i32
    %c0_i32_1 = arith.constant 0 : i32
    return %c0_i32, %c0_i32_0 : i32, i32
  }
  func.func @transform_3(%arg0: i32) -> (i32, i32) {
    %c0_i32 = arith.constant 0 : i32
    %c0_i32_0 = arith.constant 0 : i32
    return %arg0, %c0_i32 : i32, i32
  }
}

</mosaic_0001>

<llo_original>
// kernel: patch_embed_pallas.1
$region0: #{patch_embed_pallas.1}
  #allocation0 [shape = 'u32[]', space=smem, size = 0x4, offset = 0x4, fixed_abs, tag = 'smem constant byte address 0x4 - core index']
  #allocation1 [shape = 'u32[144,128]{1,0:T(1,128)}', space=vmem, size = 0x12000, scoped, tag = 'internal scratch']
  %s0 = inlined_call_operand.vmem [shape: bf16[32,64], index: 0, kind: input, shape index: {}]
  %s1 = inlined_call_operand.vmem [shape: bf16[64,128], index: 1, kind: input, shape index: {}]
  %s2 = inlined_call_operand.vmem [shape: f32[1,128], index: 2, kind: input, shape index: {}]
  %s3 = inlined_call_operand.hbm [shape: f32[32,128], index: 3, kind: output, shape index: {}]
  %s4 = sld [smem:[#allocation0]]
  $region45: #{patch_embed_pallas.1} parent=0
    _
  %s6 = ssub.s32 1, %s4
  %s7 = scalar_select 0, %s6, %s4
  $region1: #{patch_embed_pallas.1} parent=0
    #allocation2 [shape = 'u8[16384]{0}', space=vmem, size = 0x4000, scoped, tag = 'output window, operand 0']
    #allocation3 [shape = 's32[2]{0}', space=sflag, size = 0x8, scoped, tag = 'scoped memory for patch_embed_pallas.1']
    %8 = vsyncpa [#allocation3], 0
    %s9 = scalar_lea.sflag [#allocation3], 1
    %10 = vsyncpa %s9, 0
    loop: start=0, step=1, limit=4
    $region2: #{patch_embed_pallas.1} parent=1 // loop_pre_header
      _
    $region3: #{patch_embed_pallas.1} parent=1 // loop_header
      %s12 = sphi 0, %s16
      %p13 = scmp.ge.s32.totalorder %s12, 4
      %s22 = sphi 0, %s24
      %s25 = sphi 0, %s22
      %s26 = sphi 0, %s25
      %s42 = sphi 0, %s26
      %s46 = sphi 0, %s46
      %s48 = sphi 0, %s46
      %s49 = sphi 0, %s48
      %s63 = sphi 0, %s49
      %s67 = sphi 0, %s67
      %s69 = sphi 0, %s67
      %s70 = sphi 0, %s69
      %s84 = sphi 0, %s70
      %s90 = sphi 0, %s92
      %s93 = sphi 0, %s90
      %s94 = sphi 0, %s93
      %s110 = sphi 0, %s94
    $region4: #{patch_embed_pallas.1} parent=1 // loop_header_branch
      %15 = sbr.rel (%p13) target = $region8
    $region5: #{patch_embed_pallas.1} parent=1 // loop_body
      %s17 = ssub.s32 %s12, 1
      %s18 = ssub.s32 %s12, 2
      %s19 = sadd.s32 %s12, 1
      %s20 = ssub.s32 %s12, %s19
      %p21 = scmp.eq.s32.totalorder %s20, 0
      %s23 = sadd.s32 %s22, 1
      %s24 = scalar_select %p21, %s22, %s23
      %p27 = pneg %p21
      %p28 = scmp.eq.s32.totalorder %s12, 1
      %p29 = por %p27, %p28
      %p30 = scmp.ne.s32.totalorder %s22, %s25
      %p31 = scmp.eq.s32.totalorder %s12, 0
      %p32 = por %p30, %p31
      %p33 = scmp.ne.s32.totalorder %s22, %s25
      %p34 = scmp.eq.s32.totalorder %s17, 1
      %p35 = por %p33, %p34
      %p36 = scmp.ne.s32.totalorder %s25, %s26
      %p37 = scmp.eq.s32.totalorder %s17, 0
      %p38 = por %p36, %p37
      %p39 = scmp.ne.s32.totalorder %s25, %s26
      %p40 = scmp.eq.s32.totalorder %s18, 1
      %p41 = por %p39, %p40
      %p43 = scmp.ne.s32.totalorder %s26, %s42
      %p44 = scmp.eq.s32.totalorder %s18, 0
      %p45 = por %p43, %p44
      %s47 = sadd.s32 %s46, 1
      %p50 = scmp.eq.s32.totalorder %s12, 1
      %p51 = scmp.ne.s32.totalorder %s46, %s48
      %p52 = scmp.eq.s32.totalorder %s12, 0
      %p53 = por %p51, %p52
      %p54 = scmp.ne.s32.totalorder %s46, %s48
      %p55 = scmp.eq.s32.totalorder %s17, 1
      %p56 = por %p54, %p55
      %p57 = scmp.ne.s32.totalorder %s48, %s49
      %p58 = scmp.eq.s32.totalorder %s17, 0
      %p59 = por %p57, %p58
      %p60 = scmp.ne.s32.totalorder %s48, %s49
      %p61 = scmp.eq.s32.totalorder %s18, 1
      %p62 = por %p60, %p61
      %p64 = scmp.ne.s32.totalorder %s49, %s63
      %p65 = scmp.eq.s32.totalorder %s18, 0
      %p66 = por %p64, %p65
      %s68 = sadd.s32 %s67, 1
      %p71 = scmp.eq.s32.totalorder %s12, 1
      %p72 = scmp.ne.s32.totalorder %s67, %s69
      %p73 = scmp.eq.s32.totalorder %s12, 0
      %p74 = por %p72, %p73
      %p75 = scmp.ne.s32.totalorder %s67, %s69
      %p76 = scmp.eq.s32.totalorder %s17, 1
      %p77 = por %p75, %p76
      %p78 = scmp.ne.s32.totalorder %s69, %s70
      %p79 = scmp.eq.s32.totalorder %s17, 0
      %p80 = por %p78, %p79
      %p81 = scmp.ne.s32.totalorder %s69, %s70
      %p82 = scmp.eq.s32.totalorder %s18, 1
      %p83 = por %p81, %p82
      %p85 = scmp.ne.s32.totalorder %s70, %s84
      %p86 = scmp.eq.s32.totalorder %s18, 0
      %p87 = por %p85, %p86
      %s88 = ssub.s32 %s12, %s19
      %p89 = scmp.eq.s32.totalorder %s88, 0
      %s91 = sadd.s32 %s90, 1
      %s92 = scalar_select %p89, %s90, %s91
      %p95 = pneg %p89
      %p96 = scmp.eq.s32.totalorder %s12, 1
      %p97 = por %p95, %p96
      %p98 = scmp.ne.s32.totalorder %s90, %s93
      %p99 = scmp.eq.s32.totalorder %s12, 0
      %p100 = por %p98, %p99
      %p101 = scmp.ne.s32.totalorder %s90, %s93
      %p102 = scmp.eq.s32.totalorder %s17, 1
      %p103 = por %p101, %p102
      %p104 = scmp.ne.s32.totalorder %s93, %s94
      %p105 = scmp.eq.s32.totalorder %s17, 0
      %p106 = por %p104, %p105
      %p107 = scmp.ne.s32.totalorder %s93, %s94
      %p108 = scmp.eq.s32.totalorder %s18, 1
      %p109 = por %p107, %p108
      %p111 = scmp.ne.s32.totalorder %s94, %s110
      %p112 = scmp.eq.s32.totalorder %s18, 0
      %p113 = por %p111, %p112
      %p114 = scmp.le.s32.totalorder 1, %s12
      %p115 = scmp.lt.s32.totalorder %s12, 3
      %p116 = pnand %p114, %p115
      %p117 = pneg %p116
      // Predicated region
      $region9: #{patch_embed_pallas.1} parent=5 // pred_check
        _
      $region10: #{patch_embed_pallas.1} parent=5 // pred_check_branch
        %119 = sbr.rel (%p116) target = $region12
      $region11: #{patch_embed_pallas.1} parent=5 // pred_region
        %s120 = ssub.s32 %s12, 1
        // Predicated region
        $region13: #{patch_embed_pallas.1} parent=11 // pred_check
          %p121 = pneg %p59
        $region14: #{patch_embed_pallas.1} parent=11 // pred_check_branch
          %123 = sbr.rel (%p121) target = $region16
        $region15: #{patch_embed_pallas.1} parent=11 // pred_region
          _
        $region16: #{patch_embed_pallas.1} parent=11 // pred_fallthru
          _
        // Predicated region
        $region17: #{patch_embed_pallas.1} parent=11 // pred_check
          %p124 = pneg %p80
        $region18: #{patch_embed_pallas.1} parent=11 // pred_check_branch
          %126 = sbr.rel (%p124) target = $region20
        $region19: #{patch_embed_pallas.1} parent=11 // pred_region
          _
        $region20: #{patch_embed_pallas.1} parent=11 // pred_fallthru
          _
      $region12: #{patch_embed_pallas.1} parent=5 // pred_fallthru
        _
      %p127 = scmp.lt.s32.totalorder %s12, 2
      // Predicated region
      $region21: #{patch_embed_pallas.1} parent=5 // pred_check
        %p128 = pneg %p127
      $region22: #{patch_embed_pallas.1} parent=5 // pred_check_branch
        %130 = sbr.rel (%p128) target = $region24
      $region23: #{patch_embed_pallas.1} parent=5 // pred_region
        // Predicated region
        $region25: #{patch_embed_pallas.1} parent=23 // pred_check
          %p131 = pneg %p32
        $region26: #{patch_embed_pallas.1} parent=23 // pred_check_branch
          %133 = sbr.rel (%p131) target = $region28
        $region27: #{patch_embed_pallas.1} parent=23 // pred_region
          %s134 = smul.u32 2, %s12
          %p135 = scmp.lt.s32.totalorder %s134, 3
          %s136 = scalar_select %p135, %s134, 3
          %s137 = smul.addr %s136, 4
          %s138 = scalar_lea.vmem %s0, %s137
          %s139 = smul.u32 2, %s12
        $region28: #{patch_embed_pallas.1} parent=23 // pred_fallthru
          _
      $region24: #{patch_embed_pallas.1} parent=5 // pred_fallthru
        _
      %p140 = scmp.le.s32.totalorder 1, %s12
      %p141 = scmp.lt.s32.totalorder %s12, 3
      %p142 = pnand %p140, %p141
      %p143 = pneg %p142
      // Predicated region
      $region29: #{patch_embed_pallas.1} parent=5 // pred_check
        _
      $region30: #{patch_embed_pallas.1} parent=5 // pred_check_branch
        %145 = sbr.rel (%p142) target = $region32
      $region31: #{patch_embed_pallas.1} parent=5 // pred_region
        %s146 = ssub.s32 %s12, 1
        %s147 = smul.u32 2, %s17
        %p148 = scmp.lt.s32.totalorder %s147, 3
        %s149 = scalar_select %p148, %s147, 3
        %s150 = smul.addr %s149, 4
        %s151 = scalar_lea.vmem %s0, %s150
        %p152 = pneg %p38
        %p153 = pneg %p35
        %p154 = pneg %p59
        %p155 = pneg %p56
        %p156 = pneg %p80
        %p157 = pneg %p77
        %p158 = pneg %p106
        %p159 = pneg %p103
        %s160 = sand.u32 %s93, 1
        %s161 = scalar_lea.sflag [#allocation3], %s160
        %s162 = sand.u32 %s93, 1
        %s163 = smul.addr %s162, 16
        %s164 = scalar_lea.vmem [#allocation2], %s163
        %s165 = smul.u32 2, %s17
        %p166 = scmp.lt.s32.totalorder %s165, 3
        %s167 = scalar_select %p166, %s165, 3
        %s168 = smul.addr %s167, 4
        %s169 = scalar_lea.vmem %s0, %s168
        %s170 = smul.u32 2, %s17
        %s171 = smul.u32 2, %s17
        %v173 = vld [vmem:[%s169] sm:$0xf]
        %v174 = vld [vmem:[%s169 + $0x4] sm:$0xf]
        %v175 = vld [vmem:[%s1] sm:$0xf]
        %v176 = vld [vmem:[%s1 + $0x4] sm:$0xf]
        %v177 = vld [vmem:[%s1 + $0x8] sm:$0xf]
        %v178 = vld [vmem:[%s1 + $0xc] sm:$0xf]
        %v179 = vld [vmem:[%s1 + $0x10] sm:$0xf]
        %v180 = vld [vmem:[%s1 + $0x14] sm:$0xf]
        %v181 = vld [vmem:[%s1 + $0x18] sm:$0xf]
        %v182 = vld [vmem:[%s1 + $0x1c] sm:$0xf]
        %v183 = vld [vmem:[%s2] sm:$0x1]
        %v185 = vlaneseq
        %v186 = vshrl.u32 %v185, 7
        %v187 = vsub.s32 0, %v186
        %v188 = vrot.slane %v183, %v187
        %v192 = vunpack.c.l.b16 %v173
        %v193 = vunpack.c.l.b16 %v174
        %v194 = vpack.c.b16 %v193, %v192
        %v203 = vunpack.c.l.b16 %v175
        %v204 = vunpack.c.l.b16 %v176
        %v205 = vunpack.c.l.b16 %v177
        %v206 = vunpack.c.l.b16 %v178
        %v207 = vunpack.c.l.b16 %v179
        %v208 = vunpack.c.l.b16 %v180
        %v209 = vunpack.c.l.b16 %v181
        %v210 = vunpack.c.l.b16 %v182
        %v211 = vpack.c.b16 %v204, %v203
        %v212 = vpack.c.b16 %v206, %v205
        %v213 = vpack.c.b16 %v208, %v207
        %v214 = vpack.c.b16 %v210, %v209
        %vm219 = vcmask 523264
        %v221 = vsel %vm219, %v194, 0
        %223 = vmatprep.subr.bf16.mxu0 0
        %224 = vmatpush1.bf16.msra.mxu0 %v211
        %225 = vmatprep.subr.bf16.mxu0 0
        %226 = vmatpush1.bf16.msra.mxu0 %v212
        %227 = vmatprep.subr.bf16.mxu0 0
        %228 = vmatpush1.bf16.msra.mxu0 %v213
        %229 = vmatprep.subr.bf16.mxu0 0
        %230 = vmatpush1.bf16.msra.mxu0 %v214
        %231 = vmatprep.subr.bf16.mxu0 0
        %232 = vmatpush1.bf16.msra.mxu0 0
        %233 = vmatprep.subr.bf16.mxu0 0
        %234 = vmatpush1.bf16.msra.mxu0 0
        %235 = vmatprep.subr.bf16.mxu0 0
        %236 = vmatpush1.bf16.msra.mxu0 0
        %237 = vmatprep.subr.bf16.mxu0 0
        %238 = vmatpush1.bf16.msra.mxu0 0
        %239 = vmatprep.subr.bf16.mxu0 0
        %240 = vmatpush1.bf16.msra.mxu0 0
        %241 = vmatprep.subr.bf16.mxu0 0
        %242 = vmatpush1.bf16.msra.mxu0 0
        %243 = vmatprep.subr.bf16.mxu0 0
        %244 = vmatpush1.bf16.msra.mxu0 0
        %245 = vmatprep.subr.bf16.mxu0 0
        %246 = vmatpush1.bf16.msra.mxu0 0
        %247 = vmatprep.subr.bf16.mxu0 0
        %248 = vmatpush1.bf16.msra.mxu0 0
        %249 = vmatprep.subr.bf16.mxu0 0
        %250 = vmatpush1.bf16.msra.mxu0 0
        %251 = vmatprep.subr.bf16.mxu0 0
        %252 = vmatpush1.bf16.msra.mxu0 0
        %253 = vmatprep.subr.bf16.mxu0 0
        %254 = vmatpush1.bf16.msra.mxu0 0
        %255 = vmatprep.mubr.bf16.mxu0 0
        %256 = vmatmul.mubr.bf16.gmra.mrb[0].mxu0 %v221
        %v257 = vpop.f32.mrb[0].mxu0
        %v258 = vadd.f32 %v188, %v257
        %v259 = vpop.f32.mrb[0].mxu0
        %v260 = vpop.f32.mrb[0].mxu0
        %v261 = vadd.f32 %v188, %v260
        %v262 = vpop.f32.mrb[0].mxu0
        %263 = vdwg.mxu0
        %264 = vst [vmem:[%s164] sm:$0xff] %v258
        %265 = vst [vmem:[%s164 + $0x8] sm:$0xff] %v261
        %s266 = sand.u32 %s93, 1
        %s267 = scalar_lea.sflag [#allocation3], %s266
        %s268 = sand.u32 %s93, 1
        %s269 = smul.addr %s268, 16
        %s270 = scalar_lea.vmem [#allocation2], %s269
        // Predicated region
        $region33: #{patch_embed_pallas.1} parent=31 // pred_check
          %p271 = pneg %p103
        $region34: #{patch_embed_pallas.1} parent=31 // pred_check_branch
          %273 = sbr.rel (%p271) target = $region36
        $region35: #{patch_embed_pallas.1} parent=31 // pred_region
          %s274 = smul.u32 2, %s17
          %s276 = ssub.s32 256, 256
          %277 = vsyncadd %s267, %s276
          %s278 = smul.addr %s274, 128
          %s279 = scalar_lea.hbm %s3, %s278
          %s280 = sshll.u32 %s270, 4
          %s281 = int_to_ptr.vmem [resolvable:$true] %s280
          %286 = dma.vmem_to_hbm [thread:$0]  %s281, 256, %s279, %s267, 128, 128, 8
        $region36: #{patch_embed_pallas.1} parent=31 // pred_fallthru
          _
      $region32: #{patch_embed_pallas.1} parent=5 // pred_fallthru
        _
      %p287 = scmp.le.s32.totalorder 2, %s12
      // Predicated region
      $region37: #{patch_embed_pallas.1} parent=5 // pred_check
        %p288 = pneg %p287
      $region38: #{patch_embed_pallas.1} parent=5 // pred_check_branch
        %290 = sbr.rel (%p288) target = $region40
      $region39: #{patch_embed_pallas.1} parent=5 // pred_region
        %s291 = ssub.s32 %s12, 2
        // Predicated region
        $region41: #{patch_embed_pallas.1} parent=39 // pred_check
          %p292 = pneg %p109
        $region42: #{patch_embed_pallas.1} parent=39 // pred_check_branch
          %294 = sbr.rel (%p292) target = $region44
        $region43: #{patch_embed_pallas.1} parent=39 // pred_region
          %s295 = sand.u32 %s94, 1
          %s296 = scalar_lea.sflag [#allocation3], %s295
          %s297 = sand.u32 %s94, 1
          %s298 = smul.addr %s297, 16
          %s299 = scalar_lea.vmem [#allocation2], %s298
          %300 = dma.done %s296, 256
        $region44: #{patch_embed_pallas.1} parent=39 // pred_fallthru
          _
      $region40: #{patch_embed_pallas.1} parent=5 // pred_fallthru
        _
    $region6: #{patch_embed_pallas.1} parent=1 // loop_footer
      %s16 = sadd.s32 1, %s12
    $region7: #{patch_embed_pallas.1} parent=1 // loop_footer_branch
      %11 = sbr.rel target = $region3
    $region8: #{patch_embed_pallas.1} parent=1 // loop_exit
      _
    %301 = vsyncpa [#allocation3], 1
    %s302 = scalar_lea.sflag [#allocation3], 1
    %303 = vsyncpa %s302, 1

</llo_original>
